<compile_context>
chip_gen: v5e
topology: v5e:2x2
jax: 0.10.0
libtpu: 0.0.40
codegen_flags: <defaults>
</compile_context>

<pallas_src>
import jax
import jax.numpy as jnp
from jax.experimental import pallas as pl
from jax.experimental.pallas import tpu as pltpu


# ----------------------------------------------------------------------------
# Pallas kernel 1: fused gating logits  (B, N) @ (N, 2E) -> (B, 2E)
#   columns [:E]  = clean logits (x @ w_gate)
#   columns [E:]  = raw noise stddev (x @ w_noise)
# ----------------------------------------------------------------------------
def _gating_kernel(x_ref, w_ref, o_ref):
    o_ref[...] = jnp.dot(x_ref[...], w_ref[...], preferred_element_type=jnp.float32)


def gating_logits(x, w_gate, w_noise):
    B, N = x.shape
    E = w_gate.shape[1]
    w_both = jnp.concatenate([w_gate, w_noise], axis=1).astype(jnp.float32)
    out = pl.pallas_call(
        _gating_kernel,
        out_shape=jax.ShapeDtypeStruct((B, 2 * E), jnp.float32),
        grid=(1,),
        in_specs=[
            pl.BlockSpec((B, N), lambda i: (0, 0)),
            pl.BlockSpec((N, 2 * E), lambda i: (0, 0)),
        ],
        out_specs=pl.BlockSpec((B, 2 * E), lambda i: (0, 0)),
    )(x.astype(jnp.float32), w_both)
    # TODO(synk): for very large nb_item, tile the N contraction (grid over N + f32
    # accumulator) instead of a single full-array block.
    return out[:, :E], out[:, E:]


# ----------------------------------------------------------------------------
# Pallas kernel 2: fused experts + gate-weighted combination (expert grid collapsed).
#   h   = sigmoid(x @ W1_flat + b1_flat)          # (B, E*H), f32
#   gh  = gates_expanded * h                      # gate of expert e scales its H-slice
#   y_t = gh @ W2_flat[:, tile] + gates @ b2_flat[:, tile]
# Grid axis = output nb_item tile (independent -> "parallel").
# ----------------------------------------------------------------------------
def _fused_combine_kernel(x_ref, w1_ref, b1_ref, ge_ref, g_ref, w2_ref, b2_ref, y_ref):
    h = jax.nn.sigmoid(
        jnp.dot(x_ref[...], w1_ref[...], preferred_element_type=jnp.float32) + b1_ref[...]
    )
    gh = (ge_ref[...] * h).astype(w2_ref.dtype)
    y = jnp.dot(gh, w2_ref[...], preferred_element_type=jnp.float32)
    y += jnp.dot(g_ref[...], b2_ref[...], preferred_element_type=jnp.float32)
    y_ref[...] = y


def _pick_tile(n):
    for t in (512, 256, 128):
        if n % t == 0:
            return t
    return n


def moe_combine(x, w1, b1, w2, b2, gates):
    B, N = x.shape
    E, _, H = w1.shape
    EH = E * H

    # Flatten experts onto the contraction axis (algebraically the gate-weighted expert sum).
    w1_flat = jnp.transpose(w1, (1, 0, 2)).reshape(N, EH).astype(jnp.bfloat16)
    b1_flat = b1.reshape(1, EH).astype(jnp.float32)
    w2_flat = w2.reshape(EH, N).astype(jnp.bfloat16)
    b2_flat = b2.reshape(E, N).astype(jnp.float32)
    gates = gates.astype(jnp.float32)
    gates_exp = jnp.repeat(gates, H, axis=1)  # (B, E*H), lane-dense

    tn = _pick_tile(N)
    return pl.pallas_call(
        _fused_combine_kernel,
        out_shape=jax.ShapeDtypeStruct((B, N), jnp.float32),
        grid=(N // tn,),
        in_specs=[
            pl.BlockSpec((B, N), lambda j: (0, 0)),
            pl.BlockSpec((N, EH), lambda j: (0, 0)),
            pl.BlockSpec((1, EH), lambda j: (0, 0)),
            pl.BlockSpec((B, EH), lambda j: (0, 0)),
            pl.BlockSpec((B, E), lambda j: (0, 0)),
            pl.BlockSpec((EH, tn), lambda j: (0, j)),
            pl.BlockSpec((E, tn), lambda j: (0, j)),
        ],
        out_specs=pl.BlockSpec((B, tn), lambda j: (0, j)),
        compiler_params=pltpu.CompilerParams(dimension_semantics=("parallel",)),
    )(x.astype(jnp.bfloat16), w1_flat, b1_flat, gates_exp, gates, w2_flat, b2_flat)


# ----------------------------------------------------------------------------
# JAX glue reproducing SparseMOE / myMoE semantics
# ----------------------------------------------------------------------------
def cv_squared(x):
    eps = 1e-10
    x = x.astype(jnp.float32)
    if x.shape[0] == 1:
        return jnp.zeros((), jnp.float32)
    # torch .var() is unbiased (ddof=1)
    return jnp.var(x, ddof=1) / (jnp.mean(x) ** 2 + eps)


def _normal_cdf(v):
    return 0.5 * (1.0 + jax.lax.erf(v / jnp.sqrt(2.0).astype(v.dtype)))


def _prob_in_top_k(clean_values, noisy_values, noise_stddev, noisy_top_values, k):
    batch = clean_values.shape[0]
    m = noisy_top_values.shape[1]
    top_values_flat = noisy_top_values.reshape(-1)
    threshold_positions_if_in = jnp.arange(batch) * m + k
    threshold_if_in = top_values_flat[threshold_positions_if_in][:, None]
    is_in = noisy_values > threshold_if_in
    threshold_if_out = top_values_flat[threshold_positions_if_in - 1][:, None]
    prob_if_in = _normal_cdf((clean_values - threshold_if_in) / noise_stddev)
    prob_if_out = _normal_cdf((clean_values - threshold_if_out) / noise_stddev)
    return jnp.where(is_in, prob_if_in, prob_if_out)


def noisy_top_k_gating(x, w_gate, w_noise, k, num_expert, training, noise_key,
                       noise_epsilon=0.01):
    clean_logits, raw_noise_stddev = gating_logits(x, w_gate, w_noise)
    if training:
        noise_stddev = jax.nn.softplus(raw_noise_stddev) + noise_epsilon
        noise = jax.random.normal(noise_key, clean_logits.shape, jnp.float32)
        noisy_logits = clean_logits + noise * noise_stddev
        logits = noisy_logits
    else:
        logits = clean_logits

    m = min(k + 1, num_expert)
    top_logits, top_indices = jax.lax.top_k(logits, m)
    top_k_logits = top_logits[:, :k]
    top_k_indices = top_indices[:, :k]
    top_k_gates = jax.nn.softmax(top_k_logits, axis=1)

    B = logits.shape[0]
    gates = jnp.zeros_like(logits).at[
        jnp.arange(B)[:, None], top_k_indices
    ].set(top_k_gates)

    if training and k < num_expert:
        load = _prob_in_top_k(clean_logits, noisy_logits, noise_stddev, top_logits, k).sum(0)
    else:
        load = (gates > 0).sum(0).astype(jnp.float32)
    return gates, load


def my_moe_forward(params, uid, purchase_vec, *, k, num_expert, training,
                   noise_key, loss_coef=0.01):
    del uid  # TODO(synk): expert_selector(uid, purchase_vec, stage=s) definition is not
    # provided; each expert stage is synthesized as a sigmoid autoencoder on purchase_vec
    # (uid / id2item embedding unused, matching the given forward which never uses id2item).
    x = purchase_vec
    gates, load = noisy_top_k_gating(
        x, params["w_gate"], params["w_noise"], k, num_expert, training, noise_key
    )
    importance = gates.sum(0)
    loss = (cv_squared(importance) + cv_squared(load)) * loss_coef
    y = moe_combine(x, params["w1"], params["b1"], params["w2"], params["b2"], gates)
    return y, loss


# ----------------------------------------------------------------------------
if __name__ == "__main__":
    B, nb_item, hidden, E, K, nb_user = 8, 256, 32, 4, 2, 16   # E*hidden = 128 contraction

    key = jax.random.PRNGKey(0)
    k_pv, k_uid, k_wg, k_wn, k_w1, k_w2, k_noise, k_emb = jax.random.split(key, 8)

    purchase_vec = jax.random.bernoulli(k_pv, 0.3, (B, nb_item)).astype(jnp.float32)
    uid = jax.random.randint(k_uid, (B,), 0, nb_user)

    # Reference __init__ zero-inits w_gate / w_noise; use small deterministic random
    # values instead so the gating matmul / top-k paths are non-degenerate.
    params = dict(
        w_gate=0.1 * jax.random.normal(k_wg, (nb_item, E), jnp.float32),
        w_noise=0.1 * jax.random.normal(k_wn, (nb_item, E), jnp.float32),
        w1=0.1 * jax.random.normal(k_w1, (E, nb_item, hidden), jnp.float32),
        b1=jnp.zeros((E, 1, hidden), jnp.float32),
        w2=0.1 * jax.random.normal(k_w2, (E, hidden, nb_item), jnp.float32),
        b2=jnp.zeros((E, 1, nb_item), jnp.float32),
        # id2item embedding exists in the module but is unused in forward:
        id2item=0.1 * jax.random.normal(k_emb, (nb_user, nb_item), jnp.float32),
    )

    y, loss = my_moe_forward(
        params, uid, purchase_vec,
        k=K, num_expert=E, training=True, noise_key=k_noise, loss_coef=0.01,
    )
    jax.block_until_ready((y, loss))
    assert y.shape == (B, nb_item) and loss.shape == ()
    print("KERNEL_OK")
</pallas_src>

<mosaic_0001>
module attributes {stable_mosaic.version = 11 : i64} {
  func.func @_gating_kernel(%arg0: i32, %arg1: memref<8x256xf32, #tpu.memory_space<vmem>>, %arg2: memref<256x8xf32, #tpu.memory_space<vmem>>, %arg3: memref<8x8xf32, #tpu.memory_space<vmem>>) attributes {dimension_semantics = [#tpu.dimension_semantics<arbitrary>], iteration_bounds = array<i64: 1>, scalar_prefetch = 0 : i64, scratch_operands = 0 : i64, tpu.core_type = #tpu.core_type<tc>, window_params = [{pipeline_mode = #tpu.pipeline_mode<synchronous>, transform_indices = @transform_0, window_bounds = array<i64: 8, 256>}, {pipeline_mode = #tpu.pipeline_mode<synchronous>, transform_indices = @transform_1, window_bounds = array<i64: 256, 8>}, {pipeline_mode = #tpu.pipeline_mode<synchronous>, transform_indices = @transform_2, window_bounds = array<i64: 8, 8>}]} {
    %c0 = arith.constant 0 : index
    %c0_0 = arith.constant 0 : index
    %0 = vector.load %arg1[%c0, %c0_0] : memref<8x256xf32, #tpu.memory_space<vmem>>, vector<8x256xf32>
    %c0_1 = arith.constant 0 : index
    %c0_2 = arith.constant 0 : index
    %1 = vector.load %arg2[%c0_1, %c0_2] : memref<256x8xf32, #tpu.memory_space<vmem>>, vector<256x8xf32>
    %cst = arith.constant dense<0.000000e+00> : vector<8x8xf32>
    %2 = tpu.matmul %0, %1, %cst {dimension_numbers = #tpu.dot_dimension_numbers<[1], [0], [0], [1], [0, 0, 1, 1], [], []>} : vector<8x256xf32>, vector<256x8xf32>, vector<8x8xf32> -> vector<8x8xf32>
    %c0_3 = arith.constant 0 : index
    %c0_4 = arith.constant 0 : index
    %3 = vector.load %arg3[%c0_3, %c0_4] : memref<8x8xf32, #tpu.memory_space<vmem>>, vector<8x8xf32>
    tpu.vector_store %arg3[%c0_3, %c0_4], %2 {strides = array<i32>} : memref<8x8xf32, #tpu.memory_space<vmem>>, vector<8x8xf32>,
    return
  }
  func.func @transform_0(%arg0: i32) -> (i32, i32) {
    %c0_i32 = arith.constant 0 : i32
    %c0_i32_0 = arith.constant 0 : i32
    %c0_i32_1 = arith.constant 0 : i32
    return %c0_i32, %c0_i32_0 : i32, i32
  }
  func.func @transform_1(%arg0: i32) -> (i32, i32) {
    %c0_i32 = arith.constant 0 : i32
    %c0_i32_0 = arith.constant 0 : i32
    %c0_i32_1 = arith.constant 0 : i32
    return %c0_i32, %c0_i32_0 : i32, i32
  }
  func.func @transform_2(%arg0: i32) -> (i32, i32) {
    %c0_i32 = arith.constant 0 : i32
    %c0_i32_0 = arith.constant 0 : i32
    %c0_i32_1 = arith.constant 0 : i32
    return %c0_i32, %c0_i32_0 : i32, i32
  }
}

</mosaic_0001>

<llo_original>
// kernel: tpu_custom_call.1
$region0: #{tpu_custom_call.1}
  #allocation0 [shape = 'u32[]', space=smem, size = 0x4, offset = 0x4, fixed_abs, tag = 'smem constant byte address 0x4 - core index']
  #allocation1 [shape = 'u32[72,128]{1,0:T(1,128)}', space=vmem, size = 0x9000, scoped, tag = 'internal scratch']
  %s0 = inlined_call_operand.vmem [shape: f32[8,256], index: 0, kind: input, shape index: {}]
  %s1 = inlined_call_operand.vmem [shape: f32[256,8], index: 1, kind: input, shape index: {}]
  %s2 = inlined_call_operand.hbm [shape: f32[8,8], index: 2, kind: output, shape index: {}]
  %s3 = sld [smem:[#allocation0]]
  $region18: #{tpu_custom_call.1} parent=0
    _
  %s5 = ssub.s32 1, %s3
  %s6 = scalar_select 0, %s5, %s3
  $region1: #{tpu_custom_call.1} parent=0
    #allocation2 [shape = 'u8[4096]{0}', space=vmem, size = 0x1000, scoped, tag = 'output window, operand 0, single buffered']
    #allocation3 [shape = 's32[1]{0}', space=sflag, size = 0x4, scoped, tag = 'scoped memory for tpu_custom_call.1']
    %7 = vsyncpa [#allocation3], 0
    // Predicated region
    $region2: #{tpu_custom_call.1} parent=1 // pred_check
      _
    $region3: #{tpu_custom_call.1} parent=1 // pred_check_branch
      %9 = sbr.rel (0) target = $region5
    $region4: #{tpu_custom_call.1} parent=1 // pred_region
      _
    $region5: #{tpu_custom_call.1} parent=1 // pred_fallthru
      _
    // Predicated region
    $region6: #{tpu_custom_call.1} parent=1 // pred_check
      _
    $region7: #{tpu_custom_call.1} parent=1 // pred_check_branch
      %11 = sbr.rel (0) target = $region9
    $region8: #{tpu_custom_call.1} parent=1 // pred_region
      _
    $region9: #{tpu_custom_call.1} parent=1 // pred_fallthru
      _
    %v12 = vld [vmem:[%s0] sm:$0xff]
    %v13 = vld [vmem:[%s0 + $0x8] sm:$0xff]
    %v14 = vld [vmem:[%s1] sm:$0xff]
    %v15 = vld [vmem:[%s1 + $0x8] sm:$0xff]
    %v16 = vld [vmem:[%s1 + $0x10] sm:$0xff]
    %v17 = vld [vmem:[%s1 + $0x18] sm:$0xff]
    %v18 = vld [vmem:[%s1 + $0x20] sm:$0xff]
    %v19 = vld [vmem:[%s1 + $0x28] sm:$0xff]
    %v20 = vld [vmem:[%s1 + $0x30] sm:$0xff]
    %v21 = vld [vmem:[%s1 + $0x38] sm:$0xff]
    %v22 = vld [vmem:[%s1 + $0x40] sm:$0xff]
    %v23 = vld [vmem:[%s1 + $0x48] sm:$0xff]
    %v24 = vld [vmem:[%s1 + $0x50] sm:$0xff]
    %v25 = vld [vmem:[%s1 + $0x58] sm:$0xff]
    %v26 = vld [vmem:[%s1 + $0x60] sm:$0xff]
    %v27 = vld [vmem:[%s1 + $0x68] sm:$0xff]
    %v28 = vld [vmem:[%s1 + $0x70] sm:$0xff]
    %v29 = vld [vmem:[%s1 + $0x78] sm:$0xff]
    %v30 = vld [vmem:[%s1 + $0x80] sm:$0xff]
    %v31 = vld [vmem:[%s1 + $0x88] sm:$0xff]
    %v32 = vld [vmem:[%s1 + $0x90] sm:$0xff]
    %v33 = vld [vmem:[%s1 + $0x98] sm:$0xff]
    %v34 = vld [vmem:[%s1 + $0xa0] sm:$0xff]
    %v35 = vld [vmem:[%s1 + $0xa8] sm:$0xff]
    %v36 = vld [vmem:[%s1 + $0xb0] sm:$0xff]
    %v37 = vld [vmem:[%s1 + $0xb8] sm:$0xff]
    %v38 = vld [vmem:[%s1 + $0xc0] sm:$0xff]
    %v39 = vld [vmem:[%s1 + $0xc8] sm:$0xff]
    %v40 = vld [vmem:[%s1 + $0xd0] sm:$0xff]
    %v41 = vld [vmem:[%s1 + $0xd8] sm:$0xff]
    %v42 = vld [vmem:[%s1 + $0xe0] sm:$0xff]
    %v43 = vld [vmem:[%s1 + $0xe8] sm:$0xff]
    %v44 = vld [vmem:[%s1 + $0xf0] sm:$0xff]
    %v45 = vld [vmem:[%s1 + $0xf8] sm:$0xff]
    %46 = vmatpush.msra.mxu0 %v29
    %47 = vmatpush.msra.mxu0 %v28
    %48 = vmatpush.msra.mxu0 %v27
    %49 = vmatpush.msra.mxu0 %v26
    %50 = vmatpush.msra.mxu0 %v25
    %51 = vmatpush.msra.mxu0 %v24
    %52 = vmatpush.msra.mxu0 %v23
    %53 = vmatpush.msra.mxu0 %v22
    %54 = vmatpush.msra.mxu0 %v21
    %55 = vmatpush.msra.mxu0 %v20
    %56 = vmatpush.msra.mxu0 %v19
    %57 = vmatpush.msra.mxu0 %v18
    %58 = vmatpush.msra.mxu0 %v17
    %59 = vmatpush.msra.mxu0 %v16
    %60 = vmatpush.msra.mxu0 %v15
    %61 = vmatpush.msra.mxu0 %v14
    %62 = vmatmul.f32.gmra.mxu0 %v12
    %v63 = vpop.f32.mrf.mxu0
    %v64 = vadd.f32 0.0, %v63
    %65 = vdwg.mxu0
    %66 = vmatpush.msra.mxu0 %v45
    %67 = vmatpush.msra.mxu0 %v44
    %68 = vmatpush.msra.mxu0 %v43
    %69 = vmatpush.msra.mxu0 %v42
    %70 = vmatpush.msra.mxu0 %v41
    %71 = vmatpush.msra.mxu0 %v40
    %72 = vmatpush.msra.mxu0 %v39
    %73 = vmatpush.msra.mxu0 %v38
    %74 = vmatpush.msra.mxu0 %v37
    %75 = vmatpush.msra.mxu0 %v36
    %76 = vmatpush.msra.mxu0 %v35
    %77 = vmatpush.msra.mxu0 %v34
    %78 = vmatpush.msra.mxu0 %v33
    %79 = vmatpush.msra.mxu0 %v32
    %80 = vmatpush.msra.mxu0 %v31
    %81 = vmatpush.msra.mxu0 %v30
    %82 = vmatmul.f32.gmra.mxu0 %v13
    %v83 = vpop.f32.mrf.mxu0
    %v84 = vadd.f32 %v64, %v83
    %85 = vdwg.mxu0
    %vm86 = vcmask 64512
    %87 = vst.msk [vmem:[#allocation2] sm:$0xff] %vm86, %v84
    // Predicated region
    $region10: #{tpu_custom_call.1} parent=1 // pred_check
      _
    $region11: #{tpu_custom_call.1} parent=1 // pred_check_branch
      %89 = sbr.rel (0) target = $region13
    $region12: #{tpu_custom_call.1} parent=1 // pred_region
      %91 = vsyncadd [#allocation3], 0
      %s93 = sshll.u32 [#allocation2], 4
      %s94 = int_to_ptr.vmem [resolvable:$true] %s93
      %s95 = sshll.u32 %s2, 4
      %s96 = int_to_ptr.hbm [resolvable:$true] %s95
      %98 = dma.vmem_to_hbm [thread:$0]  %s94, 128, %s96, [#allocation3]
    $region13: #{tpu_custom_call.1} parent=1 // pred_fallthru
      _
    // Predicated region
    $region14: #{tpu_custom_call.1} parent=1 // pred_check
      _
    $region15: #{tpu_custom_call.1} parent=1 // pred_check_branch
      %100 = sbr.rel (0) target = $region17
    $region16: #{tpu_custom_call.1} parent=1 // pred_region
      %102 = dma.done [#allocation3], 128
    $region17: #{tpu_custom_call.1} parent=1 // pred_fallthru
      _
    %103 = vsyncpa [#allocation3], 1

</llo_original>
